<compile_context>
chip_gen: v5e
topology: v5e:2x2
jax: 0.10.0
libtpu: 0.0.40
codegen_flags: <defaults>
</compile_context>

<pallas_src>
import jax
import jax.numpy as jnp
from jax.experimental import pallas as pl
from jax.experimental.pallas import tpu as pltpu

LAYER_WIDTH = 200
_LANE = 128
_SUBLANE = 8


def _round_up(n, m):
    return (n + m - 1) // m * m


def expert_kernel(x_ref, w1_ref, b1_ref, w2_ref, b2_ref, o_ref):
    """One (TM, D) batch tile.

    x_ref : (TM, D)  f32        w1_ref : (D, Dp) bf16   ([in, hidden_padded])
    b1_ref: (1, Dp)  f32        w2_ref : (Dp, D) bf16   ([hidden_padded, out])
    b2_ref: (1, D)   f32        o_ref  : (TM, D) f32
    """
    # Hoist bias loads once per body.
    b1 = b1_ref[...]
    b2 = b2_ref[...]

    # fc1 + ReLU: cast x to bf16 in-kernel (VPU, hidden under the DMA),
    # bf16 MXU matmul with f32 accumulation, f32 epilogue.
    x = x_ref[...].astype(jnp.bfloat16)
    h = jnp.dot(x, w1_ref[...], preferred_element_type=jnp.float32)
    h = jnp.maximum(h + b1, 0.0)

    # fc2 + ReLU: cast h to bf16 only for the MXU; epilogue in f32.
    y = jnp.dot(h.astype(jnp.bfloat16), w2_ref[...],
                preferred_element_type=jnp.float32)
    y = jnp.maximum(y + b2, 0.0)

    o_ref[...] = y.astype(o_ref.dtype)


def prepare_expert_params(w1, b1, w2, b2):
    """One-time prep: transpose to [in, out], pad hidden dim to 256, cast to bf16.

    Padded hidden columns of W1^T / rows of W2^T and padded b1 entries are
    zero, so the padded hidden activations are exactly 0 after ReLU and never
    contribute to the second matmul.
    """
    D = w1.shape[0]
    Dp = _round_up(D, _LANE)  # 200 -> 256: full MXU width on the hidden axis
    w1t = jnp.pad(w1.T, ((0, 0), (0, Dp - D))).astype(jnp.bfloat16)    # (D, Dp)
    b1r = jnp.pad(b1, (0, Dp - D)).reshape(1, Dp).astype(jnp.float32)  # (1, Dp)
    w2t = jnp.pad(w2.T, ((0, Dp - D), (0, 0))).astype(jnp.bfloat16)    # (Dp, D)
    b2r = b2.reshape(1, D).astype(jnp.float32)                         # (1, D)
    return w1t, b1r, w2t, b2r


def _pick_tm(B):
    """Batch tile size.

    - Small batches (< 64 rows): one tile covering the full batch dim
      (block dim == array dim is always legal, even when B % 8 != 0).
    - Larger batches: tiles of up to 512 rows, multiples of 8, and always
      at least 2 grid steps so v7x's two TensorCores both get work.
    """
    if B < 64:
        return B
    return min(512, _round_up(pl.cdiv(B, 2), _SUBLANE))


def expert_forward(x, prepared_params):
    """x: [B, D] f32; prepared_params from prepare_expert_params."""
    w1t, b1r, w2t, b2r = prepared_params
    B, D = x.shape
    Dp = w1t.shape[1]

    TM = _pick_tm(B)
    grid = (pl.cdiv(B, TM),)  # ragged last tile handled by Pallas masking

    cost = pl.CostEstimate(
        flops=4 * B * D * Dp,          # two (B,D)x(D/Dp,Dp/D) matmuls
        transcendentals=0,
        bytes_accessed=(B * D * 4      # x (f32 in)
                        + w1t.size * 2 + w2t.size * 2
                        + b1r.size * 4 + b2r.size * 4
                        + B * D * 4),  # out (f32)
    )

    return pl.pallas_call(
        expert_kernel,
        out_shape=jax.ShapeDtypeStruct((B, D), jnp.float32),
        grid_spec=pltpu.PrefetchScalarGridSpec(
            num_scalar_prefetch=0,
            grid=grid,
            in_specs=[
                pl.BlockSpec((TM, D), lambda i: (i, 0)),    # x: tiled over batch
                pl.BlockSpec((D, Dp), lambda i: (0, 0)),    # W1^T: VMEM-resident
                pl.BlockSpec((1, Dp), lambda i: (0, 0)),    # b1
                pl.BlockSpec((Dp, D), lambda i: (0, 0)),    # W2^T: VMEM-resident
                pl.BlockSpec((1, D), lambda i: (0, 0)),     # b2
            ],
            out_specs=pl.BlockSpec((TM, D), lambda i: (i, 0)),
        ),
        compiler_params=pltpu.CompilerParams(
            dimension_semantics=("parallel",),  # shard batch tiles across TCs (v7x)
        ),
        cost_estimate=cost,
    )(x, w1t, b1r, w2t, b2r)


def init_expert_params(key, layer_width=LAYER_WIDTH, dtype=jnp.float32):
    # Deterministic init mimicking torch.nn.Linear default (uniform +/- 1/sqrt(fan_in)).
    k1, k2, k3, k4 = jax.random.split(key, 4)
    bound = 1.0 / jnp.sqrt(layer_width)
    w1 = jax.random.uniform(k1, (layer_width, layer_width), dtype, -bound, bound)
    b1 = jax.random.uniform(k2, (layer_width,), dtype, -bound, bound)
    w2 = jax.random.uniform(k3, (layer_width, layer_width), dtype, -bound, bound)
    b2 = jax.random.uniform(k4, (layer_width,), dtype, -bound, bound)
    return w1, b1, w2, b2


def _ref_f32(x, w1, b1, w2, b2):
    h = jnp.maximum(x @ w1.T + b1, 0.0)
    return jnp.maximum(h @ w2.T + b2, 0.0)


def _ref_bf16(x, w1, b1, w2, b2):
    # Mirrors the kernel's precision: bf16 matmul inputs, f32 accumulation/epilogue.
    f = lambda a: a.astype(jnp.bfloat16).astype(jnp.float32)
    h = jnp.maximum(f(x) @ f(w1).T + b1, 0.0)
    return jnp.maximum(f(h) @ f(w2).T + b2, 0.0)


if __name__ == "__main__":
    key = jax.random.PRNGKey(0)
    kx1, kx2, kp = jax.random.split(key, 3)

    w1, b1, w2, b2 = init_expert_params(kp)
    prepared = prepare_expert_params(w1, b1, w2, b2)  # one-time weight prep

    # Small batch (single tile) and a larger batch (2-tile grid, ragged tail).
    for batch, kk in ((4, kx1), (200, kx2)):
        x = jax.random.normal(kk, (batch, LAYER_WIDTH), jnp.float32)
        out = jax.block_until_ready(expert_forward(x, prepared))
        assert out.shape == (batch, LAYER_WIDTH)
        # Tight check vs. a bf16-input reference (same precision as the kernel).
        assert jnp.allclose(out, _ref_bf16(x, w1, b1, w2, b2), atol=5e-3, rtol=5e-3)
        # Loose check vs. the full-f32 reference (bf16 matmul tolerance).
        assert jnp.allclose(out, _ref_f32(x, w1, b1, w2, b2), atol=1e-1, rtol=1e-1)

    print("KERNEL_OK")
</pallas_src>

<mosaic_0001>
module attributes {stable_mosaic.version = 11 : i64} {
  func.func @expert_kernel(%arg0: i32, %arg1: memref<4x200xf32, #tpu.memory_space<vmem>>, %arg2: memref<200x256xbf16, #tpu.memory_space<vmem>>, %arg3: memref<1x256xf32, #tpu.memory_space<vmem>>, %arg4: memref<256x200xbf16, #tpu.memory_space<vmem>>, %arg5: memref<1x200xf32, #tpu.memory_space<vmem>>, %arg6: memref<4x200xf32, #tpu.memory_space<vmem>>) attributes {dimension_semantics = [#tpu.dimension_semantics<parallel>], iteration_bounds = array<i64: 1>, scalar_prefetch = 0 : i64, scratch_operands = 0 : i64, tpu.core_type = #tpu.core_type<tc>, window_params = [{transform_indices = @transform_0, window_bounds = array<i64: 4, 200>}, {pipeline_mode = #tpu.pipeline_mode<synchronous>, transform_indices = @transform_1, window_bounds = array<i64: 200, 256>}, {pipeline_mode = #tpu.pipeline_mode<synchronous>, transform_indices = @transform_2, window_bounds = array<i64: 1, 256>}, {pipeline_mode = #tpu.pipeline_mode<synchronous>, transform_indices = @transform_3, window_bounds = array<i64: 256, 200>}, {pipeline_mode = #tpu.pipeline_mode<synchronous>, transform_indices = @transform_4, window_bounds = array<i64: 1, 200>}, {transform_indices = @transform_5, window_bounds = array<i64: 4, 200>}]} {
    %c0 = arith.constant 0 : index
    %c0_0 = arith.constant 0 : index
    %0 = vector.load %arg3[%c0, %c0_0] : memref<1x256xf32, #tpu.memory_space<vmem>>, vector<1x256xf32>
    %c0_1 = arith.constant 0 : index
    %c0_2 = arith.constant 0 : index
    %1 = vector.load %arg5[%c0_1, %c0_2] : memref<1x200xf32, #tpu.memory_space<vmem>>, vector<1x200xf32>
    %c0_3 = arith.constant 0 : index
    %c0_4 = arith.constant 0 : index
    %2 = vector.load %arg1[%c0_3, %c0_4] : memref<4x200xf32, #tpu.memory_space<vmem>>, vector<4x200xf32>
    %3 = arith.truncf %2 : vector<4x200xf32> to vector<4x200xbf16>
    %c0_5 = arith.constant 0 : index
    %c0_6 = arith.constant 0 : index
    %4 = vector.load %arg2[%c0_5, %c0_6] : memref<200x256xbf16, #tpu.memory_space<vmem>>, vector<200x256xbf16>
    %cst = arith.constant dense<0.000000e+00> : vector<4x256xf32>
    %5 = tpu.matmul %3, %4, %cst {dimension_numbers = #tpu.dot_dimension_numbers<[1], [0], [0], [1], [0, 0, 1, 1], [], []>} : vector<4x200xbf16>, vector<200x256xbf16>, vector<4x256xf32> -> vector<4x256xf32>
    %6 = vector.broadcast %0 : vector<1x256xf32> to vector<4x256xf32>
    %7 = arith.addf %5, %6 : vector<4x256xf32>
    %cst_7 = arith.constant 0.000000e+00 : f32
    %8 = vector.broadcast %cst_7 : f32 to vector<4x256xf32>
    %9 = arith.maximumf %7, %8 : vector<4x256xf32>
    %10 = arith.truncf %9 : vector<4x256xf32> to vector<4x256xbf16>
    %c0_8 = arith.constant 0 : index
    %c0_9 = arith.constant 0 : index
    %11 = vector.load %arg4[%c0_8, %c0_9] : memref<256x200xbf16, #tpu.memory_space<vmem>>, vector<256x200xbf16>
    %cst_10 = arith.constant dense<0.000000e+00> : vector<4x200xf32>
    %12 = tpu.matmul %10, %11, %cst_10 {dimension_numbers = #tpu.dot_dimension_numbers<[1], [0], [0], [1], [0, 0, 1, 1], [], []>} : vector<4x256xbf16>, vector<256x200xbf16>, vector<4x200xf32> -> vector<4x200xf32>
    %13 = vector.broadcast %1 : vector<1x200xf32> to vector<4x200xf32>
    %14 = arith.addf %12, %13 : vector<4x200xf32>
    %cst_11 = arith.constant 0.000000e+00 : f32
    %15 = vector.broadcast %cst_11 : f32 to vector<4x200xf32>
    %16 = arith.maximumf %14, %15 : vector<4x200xf32>
    %c0_12 = arith.constant 0 : index
    %c0_13 = arith.constant 0 : index
    %17 = vector.load %arg6[%c0_12, %c0_13] : memref<4x200xf32, #tpu.memory_space<vmem>>, vector<4x200xf32>
    tpu.vector_store %arg6[%c0_12, %c0_13], %16 {strides = array<i32>} : memref<4x200xf32, #tpu.memory_space<vmem>>, vector<4x200xf32>,
    return
  }
  func.func @transform_0(%arg0: i32) -> (i32, i32) {
    %c0_i32 = arith.constant 0 : i32
    %c0_i32_0 = arith.constant 0 : i32
    return %arg0, %c0_i32 : i32, i32
  }
  func.func @transform_1(%arg0: i32) -> (i32, i32) {
    %c0_i32 = arith.constant 0 : i32
    %c0_i32_0 = arith.constant 0 : i32
    %c0_i32_1 = arith.constant 0 : i32
    return %c0_i32, %c0_i32_0 : i32, i32
  }
  func.func @transform_2(%arg0: i32) -> (i32, i32) {
    %c0_i32 = arith.constant 0 : i32
    %c0_i32_0 = arith.constant 0 : i32
    %c0_i32_1 = arith.constant 0 : i32
    return %c0_i32, %c0_i32_0 : i32, i32
  }
  func.func @transform_3(%arg0: i32) -> (i32, i32) {
    %c0_i32 = arith.constant 0 : i32
    %c0_i32_0 = arith.constant 0 : i32
    %c0_i32_1 = arith.constant 0 : i32
    return %c0_i32, %c0_i32_0 : i32, i32
  }
  func.func @transform_4(%arg0: i32) -> (i32, i32) {
    %c0_i32 = arith.constant 0 : i32
    %c0_i32_0 = arith.constant 0 : i32
    %c0_i32_1 = arith.constant 0 : i32
    return %c0_i32, %c0_i32_0 : i32, i32
  }
  func.func @transform_5(%arg0: i32) -> (i32, i32) {
    %c0_i32 = arith.constant 0 : i32
    %c0_i32_0 = arith.constant 0 : i32
    return %arg0, %c0_i32 : i32, i32
  }
}

</mosaic_0001>

<llo_original>
// kernel: tpu_custom_call.1
$region0: #{tpu_custom_call.1}
  #allocation0 [shape = 'u32[]', space=smem, size = 0x4, offset = 0x4, fixed_abs, tag = 'smem constant byte address 0x4 - core index']
  #allocation1 [shape = 'u32[72,128]{1,0:T(1,128)}', space=vmem, size = 0x9000, scoped, tag = 'internal scratch']
  %s0 = inlined_call_operand.vmem [shape: f32[4,200], index: 0, kind: input, shape index: {}]
  %s1 = inlined_call_operand.vmem [shape: bf16[200,256], index: 1, kind: input, shape index: {}]
  %s2 = inlined_call_operand.vmem [shape: f32[1,256], index: 2, kind: input, shape index: {}]
  %s3 = inlined_call_operand.vmem [shape: bf16[256,200], index: 3, kind: input, shape index: {}]
  %s4 = inlined_call_operand.vmem [shape: f32[1,200], index: 4, kind: input, shape index: {}]
  %s5 = inlined_call_operand.hbm [shape: f32[4,200], index: 5, kind: output, shape index: {}]
  %s6 = sld [smem:[#allocation0]]
  $region30: #{tpu_custom_call.1} parent=0
    _
  %s8 = ssub.s32 1, %s6
  %s9 = scalar_select 0, %s8, %s6
  $region1: #{tpu_custom_call.1} parent=0
    #allocation2 [shape = 'u8[4096]{0}', space=vmem, size = 0x1000, scoped, tag = 'output window, operand 0, single buffered']
    #allocation3 [shape = 's32[1]{0}', space=sflag, size = 0x4, scoped, tag = 'scoped memory for tpu_custom_call.1']
    %10 = vsyncpa [#allocation3], 0
    // Predicated region
    $region2: #{tpu_custom_call.1} parent=1 // pred_check
      _
    $region3: #{tpu_custom_call.1} parent=1 // pred_check_branch
      %12 = sbr.rel (0) target = $region5
    $region4: #{tpu_custom_call.1} parent=1 // pred_region
      _
    $region5: #{tpu_custom_call.1} parent=1 // pred_fallthru
      _
    // Predicated region
    $region6: #{tpu_custom_call.1} parent=1 // pred_check
      _
    $region7: #{tpu_custom_call.1} parent=1 // pred_check_branch
      %14 = sbr.rel (0) target = $region9
    $region8: #{tpu_custom_call.1} parent=1 // pred_region
      _
    $region9: #{tpu_custom_call.1} parent=1 // pred_fallthru
      _
    // Predicated region
    $region10: #{tpu_custom_call.1} parent=1 // pred_check
      _
    $region11: #{tpu_custom_call.1} parent=1 // pred_check_branch
      %16 = sbr.rel (0) target = $region13
    $region12: #{tpu_custom_call.1} parent=1 // pred_region
      _
    $region13: #{tpu_custom_call.1} parent=1 // pred_fallthru
      _
    // Predicated region
    $region14: #{tpu_custom_call.1} parent=1 // pred_check
      _
    $region15: #{tpu_custom_call.1} parent=1 // pred_check_branch
      %18 = sbr.rel (0) target = $region17
    $region16: #{tpu_custom_call.1} parent=1 // pred_region
      _
    $region17: #{tpu_custom_call.1} parent=1 // pred_fallthru
      _
    // Predicated region
    $region18: #{tpu_custom_call.1} parent=1 // pred_check
      _
    $region19: #{tpu_custom_call.1} parent=1 // pred_check_branch
      %20 = sbr.rel (0) target = $region21
    $region20: #{tpu_custom_call.1} parent=1 // pred_region
      _
    $region21: #{tpu_custom_call.1} parent=1 // pred_fallthru
      _
    %v22 = vld [vmem:[%s2] sm:$0x3]
    %v23 = vld [vmem:[%s4] sm:$0x3]
    %v24 = vld [vmem:[%s0] sm:$0xff]
    %26 = vst [vmem:[#allocation1] ss:$2 sm:$0xff] %v24
    %v27 = vld.sshfl [vmem:[#allocation1] sm:$0xff pattern:$0x75316420]
    %v28 = vld.sshfl [vmem:[#allocation1 + $0x8] sm:$0xff pattern:$0x75316420]
    %v31 = vpack.c.bf16 %v27, %v27
    %v32 = vpack.c.bf16 %v28, %v28
    %v33 = vld [vmem:[%s1] sm:$0xff]
    %v34 = vld [vmem:[%s1 + $0x8] sm:$0xff]
    %v35 = vld [vmem:[%s1 + $0x10] sm:$0xff]
    %v36 = vld [vmem:[%s1 + $0x18] sm:$0xff]
    %v37 = vld [vmem:[%s1 + $0x20] sm:$0xff]
    %v38 = vld [vmem:[%s1 + $0x28] sm:$0xff]
    %v39 = vld [vmem:[%s1 + $0x30] sm:$0xff]
    %v40 = vld [vmem:[%s1 + $0x38] sm:$0xff]
    %v41 = vld [vmem:[%s1 + $0x40] sm:$0xff]
    %v42 = vld [vmem:[%s1 + $0x48] sm:$0xff]
    %v43 = vld [vmem:[%s1 + $0x50] sm:$0xff]
    %v44 = vld [vmem:[%s1 + $0x58] sm:$0xff]
    %v45 = vld [vmem:[%s1 + $0x60] sm:$0xff]
    %v46 = vld [vmem:[%s1 + $0x68] sm:$0xff]
    %v47 = vld [vmem:[%s1 + $0x70] sm:$0xff]
    %v48 = vld [vmem:[%s1 + $0x78] sm:$0xff]
    %v49 = vld [vmem:[%s1 + $0x80] sm:$0xff]
    %v50 = vld [vmem:[%s1 + $0x88] sm:$0xff]
    %v51 = vld [vmem:[%s1 + $0x90] sm:$0xff]
    %v52 = vld [vmem:[%s1 + $0x98] sm:$0xff]
    %v53 = vld [vmem:[%s1 + $0xa0] sm:$0xff]
    %v54 = vld [vmem:[%s1 + $0xa8] sm:$0xff]
    %v55 = vld [vmem:[%s1 + $0xb0] sm:$0xff]
    %v56 = vld [vmem:[%s1 + $0xb8] sm:$0xff]
    %v57 = vld [vmem:[%s1 + $0xc0] sm:$0xff]
    %v59 = vperm.slane %v22, 0
    %v60 = vperm.slane %v22, 1
    %v88 = vunpack.c.l.b16 %v33
    %v89 = vunpack.c.h.b16 %v33
    %v90 = vunpack.c.l.b16 %v34
    %v91 = vunpack.c.h.b16 %v34
    %v92 = vunpack.c.l.b16 %v35
    %v93 = vunpack.c.h.b16 %v35
    %v94 = vunpack.c.l.b16 %v36
    %v95 = vunpack.c.h.b16 %v36
    %v96 = vunpack.c.l.b16 %v37
    %v97 = vunpack.c.h.b16 %v37
    %v98 = vunpack.c.l.b16 %v38
    %v99 = vunpack.c.h.b16 %v38
    %v100 = vunpack.c.l.b16 %v39
    %v101 = vunpack.c.h.b16 %v39
    %v102 = vunpack.c.l.b16 %v40
    %v103 = vunpack.c.h.b16 %v40
    %v104 = vunpack.c.l.b16 %v41
    %v105 = vunpack.c.h.b16 %v41
    %v106 = vunpack.c.l.b16 %v42
    %v107 = vunpack.c.h.b16 %v42
    %v108 = vunpack.c.l.b16 %v43
    %v109 = vunpack.c.h.b16 %v43
    %v110 = vunpack.c.l.b16 %v44
    %v111 = vunpack.c.h.b16 %v44
    %v112 = vunpack.c.l.b16 %v45
    %v113 = vunpack.c.h.b16 %v45
    %v114 = vunpack.c.l.b16 %v46
    %v115 = vunpack.c.h.b16 %v46
    %v116 = vunpack.c.l.b16 %v47
    %v117 = vunpack.c.h.b16 %v47
    %v118 = vunpack.c.l.b16 %v48
    %v119 = vunpack.c.h.b16 %v48
    %v120 = vunpack.c.l.b16 %v49
    %v121 = vunpack.c.h.b16 %v49
    %v122 = vunpack.c.l.b16 %v50
    %v123 = vunpack.c.h.b16 %v50
    %v124 = vunpack.c.l.b16 %v51
    %v125 = vunpack.c.h.b16 %v51
    %v126 = vunpack.c.l.b16 %v52
    %v127 = vunpack.c.h.b16 %v52
    %v128 = vunpack.c.l.b16 %v53
    %v129 = vunpack.c.h.b16 %v53
    %v130 = vunpack.c.l.b16 %v54
    %v131 = vunpack.c.h.b16 %v54
    %v132 = vunpack.c.l.b16 %v55
    %v133 = vunpack.c.h.b16 %v55
    %v134 = vunpack.c.l.b16 %v56
    %v135 = vunpack.c.h.b16 %v56
    %v136 = vunpack.c.l.b16 %v57
    %v137 = vunpack.c.h.b16 %v57
    %v138 = vpack.c.b16 %v90, %v88
    %v139 = vpack.c.b16 %v91, %v89
    %v140 = vpack.c.b16 %v94, %v92
    %v141 = vpack.c.b16 %v95, %v93
    %v142 = vpack.c.b16 %v98, %v96
    %v143 = vpack.c.b16 %v99, %v97
    %v144 = vpack.c.b16 %v102, %v100
    %v145 = vpack.c.b16 %v103, %v101
    %v146 = vpack.c.b16 %v106, %v104
    %v147 = vpack.c.b16 %v107, %v105
    %v148 = vpack.c.b16 %v110, %v108
    %v149 = vpack.c.b16 %v111, %v109
    %v150 = vpack.c.b16 %v114, %v112
    %v151 = vpack.c.b16 %v115, %v113
    %v152 = vpack.c.b16 %v118, %v116
    %v153 = vpack.c.b16 %v119, %v117
    %v154 = vpack.c.b16 %v122, %v120
    %v155 = vpack.c.b16 %v123, %v121
    %v156 = vpack.c.b16 %v126, %v124
    %v157 = vpack.c.b16 %v127, %v125
    %v158 = vpack.c.b16 %v130, %v128
    %v159 = vpack.c.b16 %v131, %v129
    %v160 = vpack.c.b16 %v134, %v132
    %v161 = vpack.c.b16 %v135, %v133
    %v162 = vpack.c.b16 %v136, %v136
    %v163 = vpack.c.b16 %v137, %v137
    %vm188 = vcmask 588800
    %v190 = vsel %vm188, %v32, 0
    %vm192 = vcmask 1043456
    %v194 = vsel %vm192, %v162, 0
    %v197 = vsel %vm192, %v163, 0
    %199 = vmatpush.bf16.msra.mxu0 %v152
    %200 = vmatpush.bf16.msra.mxu0 %v150
    %201 = vmatpush.bf16.msra.mxu0 %v148
    %202 = vmatpush.bf16.msra.mxu0 %v146
    %203 = vmatpush.bf16.msra.mxu0 %v144
    %204 = vmatpush.bf16.msra.mxu0 %v142
    %205 = vmatpush.bf16.msra.mxu0 %v140
    %206 = vmatpush.bf16.msra.mxu0 %v138
    %207 = vmatmul.bf16.gmra.mxu0 %v31
    %v208 = vpop.f32.mrf.mxu0
    %v209 = vadd.f32 %v59, %v208
    %v210 = vpop.f32.mrf.mxu0
    %211 = vdwg.mxu0
    %212 = vmatpush.bf16.msra.mxu0 0
    %213 = vmatpush.bf16.msra.mxu0 0
    %214 = vmatpush.bf16.msra.mxu0 0
    %215 = vmatpush.bf16.msra.mxu0 %v194
    %216 = vmatpush.bf16.msra.mxu0 %v160
    %217 = vmatpush.bf16.msra.mxu0 %v158
    %218 = vmatpush.bf16.msra.mxu0 %v156
    %219 = vmatpush.bf16.msra.mxu0 %v154
    %220 = vmatmul.bf16.gmra.mxu0 %v190
    %v221 = vpop.f32.mrf.mxu0
    %v222 = vadd.f32 %v209, %v221
    %v223 = vpop.f32.mrf.mxu0
    %224 = vdwg.mxu0
    %225 = vmatpush.bf16.msra.mxu0 %v153
    %226 = vmatpush.bf16.msra.mxu0 %v151
    %227 = vmatpush.bf16.msra.mxu0 %v149
    %228 = vmatpush.bf16.msra.mxu0 %v147
    %229 = vmatpush.bf16.msra.mxu0 %v145
    %230 = vmatpush.bf16.msra.mxu0 %v143
    %231 = vmatpush.bf16.msra.mxu0 %v141
    %232 = vmatpush.bf16.msra.mxu0 %v139
    %233 = vmatmul.bf16.gmra.mxu0 %v31
    %v234 = vpop.f32.mrf.mxu0
    %v235 = vadd.f32 %v60, %v234
    %v236 = vpop.f32.mrf.mxu0
    %237 = vdwg.mxu0
    %238 = vmatpush.bf16.msra.mxu0 0
    %239 = vmatpush.bf16.msra.mxu0 0
    %240 = vmatpush.bf16.msra.mxu0 0
    %241 = vmatpush.bf16.msra.mxu0 %v197
    %242 = vmatpush.bf16.msra.mxu0 %v161
    %243 = vmatpush.bf16.msra.mxu0 %v159
    %244 = vmatpush.bf16.msra.mxu0 %v157
    %245 = vmatpush.bf16.msra.mxu0 %v155
    %246 = vmatmul.bf16.gmra.mxu0 %v190
    %v247 = vpop.f32.mrf.mxu0
    %v248 = vadd.f32 %v235, %v247
    %v249 = vpop.f32.mrf.mxu0
    %250 = vdwg.mxu0
    %v251 = vmax.f32 %v222, 0.0
    %v252 = vmax.f32 %v248, 0.0
    %v253 = vpack.c.bf16 %v251, %v251
    %v254 = vpack.c.bf16 %v252, %v252
    %v255 = vld [vmem:[%s3] sm:$0xff]
    %v256 = vld [vmem:[%s3 + $0x8] sm:$0xff]
    %v257 = vld [vmem:[%s3 + $0x10] sm:$0xff]
    %v258 = vld [vmem:[%s3 + $0x18] sm:$0xff]
    %v259 = vld [vmem:[%s3 + $0x20] sm:$0xff]
    %v260 = vld [vmem:[%s3 + $0x28] sm:$0xff]
    %v261 = vld [vmem:[%s3 + $0x30] sm:$0xff]
    %v262 = vld [vmem:[%s3 + $0x38] sm:$0xff]
    %v263 = vld [vmem:[%s3 + $0x40] sm:$0xff]
    %v264 = vld [vmem:[%s3 + $0x48] sm:$0xff]
    %v265 = vld [vmem:[%s3 + $0x50] sm:$0xff]
    %v266 = vld [vmem:[%s3 + $0x58] sm:$0xff]
    %v267 = vld [vmem:[%s3 + $0x60] sm:$0xff]
    %v268 = vld [vmem:[%s3 + $0x68] sm:$0xff]
    %v269 = vld [vmem:[%s3 + $0x70] sm:$0xff]
    %v270 = vld [vmem:[%s3 + $0x78] sm:$0xff]
    %v271 = vld [vmem:[%s3 + $0x80] sm:$0xff]
    %v272 = vld [vmem:[%s3 + $0x88] sm:$0xff]
    %v273 = vld [vmem:[%s3 + $0x90] sm:$0xff]
    %v274 = vld [vmem:[%s3 + $0x98] sm:$0xff]
    %v275 = vld [vmem:[%s3 + $0xa0] sm:$0xff]
    %v276 = vld [vmem:[%s3 + $0xa8] sm:$0xff]
    %v277 = vld [vmem:[%s3 + $0xb0] sm:$0xff]
    %v278 = vld [vmem:[%s3 + $0xb8] sm:$0xff]
    %v279 = vld [vmem:[%s3 + $0xc0] sm:$0xff]
    %v280 = vld [vmem:[%s3 + $0xc8] sm:$0xff]
    %v281 = vld [vmem:[%s3 + $0xd0] sm:$0xff]
    %v282 = vld [vmem:[%s3 + $0xd8] sm:$0xff]
    %v283 = vld [vmem:[%s3 + $0xe0] sm:$0xff]
    %v284 = vld [vmem:[%s3 + $0xe8] sm:$0xff]
    %v285 = vld [vmem:[%s3 + $0xf0] sm:$0xff]
    %v286 = vld [vmem:[%s3 + $0xf8] sm:$0xff]
    %v288 = vperm.slane %v23, 0
    %v289 = vperm.slane %v23, 1
    %v324 = vunpack.c.l.b16 %v255
    %v325 = vunpack.c.h.b16 %v255
    %v326 = vunpack.c.l.b16 %v256
    %v327 = vunpack.c.h.b16 %v256
    %v328 = vunpack.c.l.b16 %v257
    %v329 = vunpack.c.h.b16 %v257
    %v330 = vunpack.c.l.b16 %v258
    %v331 = vunpack.c.h.b16 %v258
    %v332 = vunpack.c.l.b16 %v259
    %v333 = vunpack.c.h.b16 %v259
    %v334 = vunpack.c.l.b16 %v260
    %v335 = vunpack.c.h.b16 %v260
    %v336 = vunpack.c.l.b16 %v261
    %v337 = vunpack.c.h.b16 %v261
    %v338 = vunpack.c.l.b16 %v262
    %v339 = vunpack.c.h.b16 %v262
    %v340 = vunpack.c.l.b16 %v263
    %v341 = vunpack.c.h.b16 %v263
    %v342 = vunpack.c.l.b16 %v264
    %v343 = vunpack.c.h.b16 %v264
    %v344 = vunpack.c.l.b16 %v265
    %v345 = vunpack.c.h.b16 %v265
    %v346 = vunpack.c.l.b16 %v266
    %v347 = vunpack.c.h.b16 %v266
    %v348 = vunpack.c.l.b16 %v267
    %v349 = vunpack.c.h.b16 %v267
    %v350 = vunpack.c.l.b16 %v268
    %v351 = vunpack.c.h.b16 %v268
    %v352 = vunpack.c.l.b16 %v269
    %v353 = vunpack.c.h.b16 %v269
    %v354 = vunpack.c.l.b16 %v270
    %v355 = vunpack.c.h.b16 %v270
    %v356 = vunpack.c.l.b16 %v271
    %v357 = vunpack.c.h.b16 %v271
    %v358 = vunpack.c.l.b16 %v272
    %v359 = vunpack.c.h.b16 %v272
    %v360 = vunpack.c.l.b16 %v273
    %v361 = vunpack.c.h.b16 %v273
    %v362 = vunpack.c.l.b16 %v274
    %v363 = vunpack.c.h.b16 %v274
    %v364 = vunpack.c.l.b16 %v275
    %v365 = vunpack.c.h.b16 %v275
    %v366 = vunpack.c.l.b16 %v276
    %v367 = vunpack.c.h.b16 %v276
    %v368 = vunpack.c.l.b16 %v277
    %v369 = vunpack.c.h.b16 %v277
    %v370 = vunpack.c.l.b16 %v278
    %v371 = vunpack.c.h.b16 %v278
    %v372 = vunpack.c.l.b16 %v279
    %v373 = vunpack.c.h.b16 %v279
    %v374 = vunpack.c.l.b16 %v280
    %v375 = vunpack.c.h.b16 %v280
    %v376 = vunpack.c.l.b16 %v281
    %v377 = vunpack.c.h.b16 %v281
    %v378 = vunpack.c.l.b16 %v282
    %v379 = vunpack.c.h.b16 %v282
    %v380 = vunpack.c.l.b16 %v283
    %v381 = vunpack.c.h.b16 %v283
    %v382 = vunpack.c.l.b16 %v284
    %v383 = vunpack.c.h.b16 %v284
    %v384 = vunpack.c.l.b16 %v285
    %v385 = vunpack.c.h.b16 %v285
    %v386 = vunpack.c.l.b16 %v286
    %v387 = vunpack.c.h.b16 %v286
    %v388 = vpack.c.b16 %v326, %v324
    %v389 = vpack.c.b16 %v327, %v325
    %v390 = vpack.c.b16 %v330, %v328
    %v391 = vpack.c.b16 %v331, %v329
    %v392 = vpack.c.b16 %v334, %v332
    %v393 = vpack.c.b16 %v335, %v333
    %v394 = vpack.c.b16 %v338, %v336
    %v395 = vpack.c.b16 %v339, %v337
    %v396 = vpack.c.b16 %v342, %v340
    %v397 = vpack.c.b16 %v343, %v341
    %v398 = vpack.c.b16 %v346, %v344
    %v399 = vpack.c.b16 %v347, %v345
    %v400 = vpack.c.b16 %v350, %v348
    %v401 = vpack.c.b16 %v351, %v349
    %v402 = vpack.c.b16 %v354, %v352
    %v403 = vpack.c.b16 %v355, %v353
    %v404 = vpack.c.b16 %v358, %v356
    %v405 = vpack.c.b16 %v359, %v357
    %v406 = vpack.c.b16 %v362, %v360
    %v407 = vpack.c.b16 %v363, %v361
    %v408 = vpack.c.b16 %v366, %v364
    %v409 = vpack.c.b16 %v367, %v365
    %v410 = vpack.c.b16 %v370, %v368
    %v411 = vpack.c.b16 %v371, %v369
    %v412 = vpack.c.b16 %v374, %v372
    %v413 = vpack.c.b16 %v375, %v373
    %v414 = vpack.c.b16 %v378, %v376
    %v415 = vpack.c.b16 %v379, %v377
    %v416 = vpack.c.b16 %v382, %v380
    %v417 = vpack.c.b16 %v383, %v381
    %v418 = vpack.c.b16 %v386, %v384
    %v419 = vpack.c.b16 %v387, %v385
    %452 = vmatpush.bf16.msra.mxu0 %v402
    %453 = vmatpush.bf16.msra.mxu0 %v400
    %454 = vmatpush.bf16.msra.mxu0 %v398
    %455 = vmatpush.bf16.msra.mxu0 %v396
    %456 = vmatpush.bf16.msra.mxu0 %v394
    %457 = vmatpush.bf16.msra.mxu0 %v392
    %458 = vmatpush.bf16.msra.mxu0 %v390
    %459 = vmatpush.bf16.msra.mxu0 %v388
    %460 = vmatmul.bf16.gmra.mxu0 %v253
    %v461 = vpop.f32.mrf.mxu0
    %v462 = vadd.f32 %v288, %v461
    %v463 = vpop.f32.mrf.mxu0
    %464 = vdwg.mxu0
    %465 = vmatpush.bf16.msra.mxu0 %v418
    %466 = vmatpush.bf16.msra.mxu0 %v416
    %467 = vmatpush.bf16.msra.mxu0 %v414
    %468 = vmatpush.bf16.msra.mxu0 %v412
    %469 = vmatpush.bf16.msra.mxu0 %v410
    %470 = vmatpush.bf16.msra.mxu0 %v408
    %471 = vmatpush.bf16.msra.mxu0 %v406
    %472 = vmatpush.bf16.msra.mxu0 %v404
    %473 = vmatmul.bf16.gmra.mxu0 %v254
    %v474 = vpop.f32.mrf.mxu0
    %v475 = vadd.f32 %v462, %v474
    %v476 = vpop.f32.mrf.mxu0
    %477 = vdwg.mxu0
    %478 = vmatpush.bf16.msra.mxu0 %v403
    %479 = vmatpush.bf16.msra.mxu0 %v401
    %480 = vmatpush.bf16.msra.mxu0 %v399
    %481 = vmatpush.bf16.msra.mxu0 %v397
    %482 = vmatpush.bf16.msra.mxu0 %v395
    %483 = vmatpush.bf16.msra.mxu0 %v393
    %484 = vmatpush.bf16.msra.mxu0 %v391
    %485 = vmatpush.bf16.msra.mxu0 %v389
    %486 = vmatmul.bf16.gmra.mxu0 %v253
    %v487 = vpop.f32.mrf.mxu0
    %v488 = vadd.f32 %v289, %v487
    %v489 = vpop.f32.mrf.mxu0
    %490 = vdwg.mxu0
    %491 = vmatpush.bf16.msra.mxu0 %v419
    %492 = vmatpush.bf16.msra.mxu0 %v417
    %493 = vmatpush.bf16.msra.mxu0 %v415
    %494 = vmatpush.bf16.msra.mxu0 %v413
    %495 = vmatpush.bf16.msra.mxu0 %v411
    %496 = vmatpush.bf16.msra.mxu0 %v409
    %497 = vmatpush.bf16.msra.mxu0 %v407
    %498 = vmatpush.bf16.msra.mxu0 %v405
    %499 = vmatmul.bf16.gmra.mxu0 %v254
    %v500 = vpop.f32.mrf.mxu0
    %v501 = vadd.f32 %v488, %v500
    %v502 = vpop.f32.mrf.mxu0
    %503 = vdwg.mxu0
    %v504 = vmax.f32 %v475, 0.0
    %v505 = vmax.f32 %v501, 0.0
    %v508 = vrot.slane %v505, 4
    %v509 = vsel %vm192, %v504, %v508
    %vm511 = vcmask 588804
    %vm512 = vmor %vm511, %vm192
    %513 = vst.msk [vmem:[#allocation2] sm:$0xff] %vm512, %v509
    // Predicated region
    $region22: #{tpu_custom_call.1} parent=1 // pred_check
      _
    $region23: #{tpu_custom_call.1} parent=1 // pred_check_branch
      %515 = sbr.rel (0) target = $region25
    $region24: #{tpu_custom_call.1} parent=1 // pred_region
      %517 = vsyncadd [#allocation3], 0
      %s519 = sshll.u32 [#allocation2], 4
      %s520 = int_to_ptr.vmem [resolvable:$true] %s519
      %s521 = sshll.u32 %s5, 4
      %s522 = int_to_ptr.hbm [resolvable:$true] %s521
      %524 = dma.vmem_to_hbm [thread:$0]  %s520, 128, %s522, [#allocation3]
    $region25: #{tpu_custom_call.1} parent=1 // pred_fallthru
      _
    // Predicated region
    $region26: #{tpu_custom_call.1} parent=1 // pred_check
      _
    $region27: #{tpu_custom_call.1} parent=1 // pred_check_branch
      %526 = sbr.rel (0) target = $region29
    $region28: #{tpu_custom_call.1} parent=1 // pred_region
      %528 = dma.done [#allocation3], 128
    $region29: #{tpu_custom_call.1} parent=1 // pred_fallthru
      _
    %529 = vsyncpa [#allocation3], 1

</llo_original>
